<compile_context>
chip_gen: v6e
topology: v6e:2x2x1
jax: 0.10.0
libtpu: 0.0.40
codegen_flags: <defaults>
</compile_context>

<pallas_src>
import functools

import jax
import jax.numpy as jnp
from jax import lax
from jax.experimental import pallas as pl
from jax.experimental.pallas import tpu as pltpu


_TWO_PI = 6.283185307179586


def _mix32(h):
    """lowbias32 finalizer (uint32 -> uint32); good avalanche on counters."""
    h = h ^ (h >> 16)
    h = h * jnp.uint32(0x7FEB352D)
    h = h ^ (h >> 15)
    h = h * jnp.uint32(0x846CA68B)
    h = h ^ (h >> 16)
    return h


def _bits_to_unit_float(h):
    """uint32 random bits -> float32 in [1, 2) via exponent-splat bitcast
    (avoids any int->float convert)."""
    return lax.bitcast_convert_type((h >> 9) | jnp.uint32(0x3F800000), jnp.float32)


def _target_noise_kernel(x_len_ref, seed_ref, out_ref, *,
                         sigma, tmin, tmax, inv_range, t_tile, t_total):
    # x_len_ref: SMEM (B,) int32 (scalar prefetch)
    # seed_ref : SMEM (1,) int32 (scalar prefetch)
    # out_ref  : VMEM (1, t_tile, D) float32 block for (batch b, time tile tt)
    b = pl.program_id(0)
    tt = pl.program_id(1)
    _, _, D = out_ref.shape
    t0 = tt * t_tile                       # first time index of this tile
    half = (t_tile + 1) // 2               # Box-Muller pairs per lane

    # ---- globally unique per-element counters ---------------------------
    # pair p covers output rows (t0 + i)  [cos half] and (t0 + half + i) [sin half]
    i_idx = lax.broadcasted_iota(jnp.int32, (half, D), 0)
    j_idx = lax.broadcasted_iota(jnp.int32, (half, D), 1)
    pair = (b * t_total + (t0 + i_idx)) * D + j_idx                  # int32, wraps
    key = seed_ref[0] * jnp.int32(-1640531527) + jnp.int32(0x12345)  # spread seed
    c1 = (pair * 2) ^ key
    c2 = (pair * 2 + 1) ^ key
    h1 = _mix32(lax.bitcast_convert_type(c1, jnp.uint32))
    h2 = _mix32(lax.bitcast_convert_type(c2, jnp.uint32))

    # ---- paired Box-Muller: one log+sqrt -> two normals ------------------
    u1 = 2.0 - _bits_to_unit_float(h1)     # (0, 1]  -> log() finite
    u2 = _bits_to_unit_float(h2) - 1.0     # [0, 1)
    r = jnp.sqrt(-2.0 * jnp.log(u1))
    theta = jnp.float32(_TWO_PI) * u2
    z = jnp.concatenate([r * jnp.cos(theta), r * jnp.sin(theta)], axis=0)
    noise = z[:t_tile]                     # (t_tile, D) iid N(0, 1)

    # ---- tta ramp on a (t_tile, 1) column, sigma folded in ---------------
    t_col = lax.broadcasted_iota(jnp.int32, (t_tile, 1), 0) + t0
    tta = jnp.maximum(
        x_len_ref[b].astype(jnp.float32) - t_col.astype(jnp.float32), 0.0)
    ramp = jnp.where(tta >= tmax, 1.0,
                     jnp.where(tta < tmin, 0.0, (tta - tmin) * inv_range))
    out_ref[0] = noise * (ramp * jnp.float32(sigma))


def _choose_t_tile(T, D):
    """Largest time tile that is a multiple of 8 dividing T (or all of T) and
    keeps the f32 output tile around ~1 MiB, so the ~8 live (tT, D) temporaries
    stay well inside the 32 MiB scoped VMEM on every TPU generation."""
    max_rows = max(8, (1 << 20) // (4 * D))
    if T <= max_rows:
        return T
    t = (max_rows // 8) * 8
    while t >= 8:
        if T % t == 0:
            return t
        t -= 8
    return T   # no nice divisor: fall back to one full row per grid step


def target_noise(x, x_len, *, seed, sigma, tmin=5, tmax=60):
    """Pallas equivalent of TargetNoise(sigma, min, max).forward(x, x_len).
    x supplies only its shape; output is iid N(0, sigma^2) * ramp, float32."""
    B, T, D = x.shape
    t_tile = _choose_t_tile(T, D)
    num_t = T // t_tile
    inv_range = 1.0 / (tmax - tmin) if tmax > tmin else 0.0

    kernel = functools.partial(
        _target_noise_kernel,
        sigma=float(sigma), tmin=float(tmin), tmax=float(tmax),
        inv_range=float(inv_range), t_tile=t_tile, t_total=T)

    grid_spec = pltpu.PrefetchScalarGridSpec(
        num_scalar_prefetch=2,             # x_len, seed -> SMEM
        grid=(B, num_t),
        in_specs=[],                       # no tensor inputs (x is shape-only)
        out_specs=pl.BlockSpec((1, t_tile, D),
                               lambda b, tt, x_len_ref, seed_ref: (b, tt, 0)),
    )
    return pl.pallas_call(
        kernel,
        out_shape=jax.ShapeDtypeStruct((B, T, D), jnp.float32),
        grid_spec=grid_spec,
        compiler_params=pltpu.CompilerParams(
            dimension_semantics=("parallel", "parallel"),
            vmem_limit_bytes=32 * 1024 * 1024),
    )(x_len.astype(jnp.int32), jnp.asarray([seed], dtype=jnp.int32))


if __name__ == "__main__":
    key = jax.random.PRNGKey(0)
    B, T, D = 2, 8, 32
    x = jax.random.normal(key, (B, T, D), dtype=jnp.float32)
    # one length >= T (ramp saturated at 1 everywhere), one < T (zero tail)
    x_len = jnp.array([70, 6], dtype=jnp.int32)
    sigma = 0.5

    out = target_noise(x, x_len, seed=1234, sigma=sigma, tmin=5, tmax=60)
    out = jax.block_until_ready(out)

    assert out.shape == (B, T, D), out.shape
    assert out.dtype == jnp.float32, out.dtype
    # Row 0: x_len=70 -> tta = 70 - t >= 63 > max=60 everywhere -> ramp == 1,
    # so out[0] is pure sigma-scaled Gaussian noise.
    assert bool(jnp.any(jnp.abs(out[0]) > 0.0))
    zs = out[0] / sigma
    assert abs(float(jnp.mean(zs))) < 0.3
    assert 0.7 < float(jnp.std(zs)) < 1.3
    # Row 1: x_len=6 -> tta = [6,5,4,3,2,1,0,0]; ramp is (6-5)/55 at t=0 and
    # exactly 0 for tta <= min=5, so out[1, 1:, :] must be exactly zero.
    assert bool(jnp.all(out[1, 1:, :] == 0.0))

    print("KERNEL_OK")
</pallas_src>

<mosaic_0001>
module attributes {stable_mosaic.version = 11 : i64} {
  func.func @_target_noise_kernel(%arg0: i32, %arg1: i32, %arg2: memref<2xi32, #tpu.memory_space<smem>>, %arg3: memref<1xi32, #tpu.memory_space<smem>>, %arg4: memref<1x8x32xf32, #tpu.memory_space<vmem>>) attributes {dimension_semantics = [#tpu.dimension_semantics<parallel>, #tpu.dimension_semantics<parallel>], iteration_bounds = array<i64: 2, 1>, scalar_prefetch = 2 : i64, scratch_operands = 0 : i64, tpu.core_type = #tpu.core_type<tc>, window_params = [{transform_indices = @transform_0, window_bounds = array<i64: 1, 8, 32>}]} {
    %c8_i32 = arith.constant 8 : i32
    %0 = arith.muli %arg1, %c8_i32 : i32
    %1 = tpu.iota {dimensions = array<i32: 0>} : vector<4x32xi32>
    %2 = tpu.iota {dimensions = array<i32: 1>} : vector<4x32xi32>
    %c8_i32_0 = arith.constant 8 : i32
    %3 = arith.muli %arg0, %c8_i32_0 : i32
    %4 = vector.broadcast %0 : i32 to vector<4x32xi32>
    %5 = arith.addi %4, %1 : vector<4x32xi32>
    %6 = vector.broadcast %3 : i32 to vector<4x32xi32>
    %7 = arith.addi %6, %5 : vector<4x32xi32>
    %c32_i32 = arith.constant 32 : i32
    %8 = vector.broadcast %c32_i32 : i32 to vector<4x32xi32>
    %9 = arith.muli %7, %8 : vector<4x32xi32>
    %10 = arith.addi %9, %2 : vector<4x32xi32>
    %c0 = arith.constant 0 : index
    %11 = memref.load %arg3[%c0] : memref<1xi32, #tpu.memory_space<smem>>
    %c-1640531527_i32 = arith.constant -1640531527 : i32
    %12 = arith.muli %11, %c-1640531527_i32 : i32
    %c74565_i32 = arith.constant 74565 : i32
    %13 = arith.addi %12, %c74565_i32 : i32
    %c2_i32 = arith.constant 2 : i32
    %14 = vector.broadcast %c2_i32 : i32 to vector<4x32xi32>
    %15 = arith.muli %10, %14 : vector<4x32xi32>
    %16 = vector.broadcast %13 : i32 to vector<4x32xi32>
    %17 = arith.xori %15, %16 : vector<4x32xi32>
    %c2_i32_1 = arith.constant 2 : i32
    %18 = vector.broadcast %c2_i32_1 : i32 to vector<4x32xi32>
    %19 = arith.muli %10, %18 : vector<4x32xi32>
    %c1_i32 = arith.constant 1 : i32
    %20 = vector.broadcast %c1_i32 : i32 to vector<4x32xi32>
    %21 = arith.addi %19, %20 : vector<4x32xi32>
    %22 = vector.broadcast %13 : i32 to vector<4x32xi32>
    %23 = arith.xori %21, %22 : vector<4x32xi32>
    %24 = tpu.bitcast %17 : vector<4x32xi32> -> vector<4x32xi32>
    %c16_i32 = arith.constant 16 : i32
    %25 = vector.broadcast %c16_i32 : i32 to vector<4x32xi32>
    %26 = arith.shrui %24, %25 : vector<4x32xi32>
    %27 = arith.xori %24, %26 : vector<4x32xi32>
    %c2146121005_i32 = arith.constant 2146121005 : i32
    %28 = vector.broadcast %c2146121005_i32 : i32 to vector<4x32xi32>
    %29 = arith.muli %27, %28 : vector<4x32xi32>
    %c15_i32 = arith.constant 15 : i32
    %30 = vector.broadcast %c15_i32 : i32 to vector<4x32xi32>
    %31 = arith.shrui %29, %30 : vector<4x32xi32>
    %32 = arith.xori %29, %31 : vector<4x32xi32>
    %c-2073254261_i32 = arith.constant -2073254261 : i32
    %33 = vector.broadcast %c-2073254261_i32 : i32 to vector<4x32xi32>
    %34 = arith.muli %32, %33 : vector<4x32xi32>
    %c16_i32_2 = arith.constant 16 : i32
    %35 = vector.broadcast %c16_i32_2 : i32 to vector<4x32xi32>
    %36 = arith.shrui %34, %35 : vector<4x32xi32>
    %37 = arith.xori %34, %36 : vector<4x32xi32>
    %38 = tpu.bitcast %23 : vector<4x32xi32> -> vector<4x32xi32>
    %c16_i32_3 = arith.constant 16 : i32
    %39 = vector.broadcast %c16_i32_3 : i32 to vector<4x32xi32>
    %40 = arith.shrui %38, %39 : vector<4x32xi32>
    %41 = arith.xori %38, %40 : vector<4x32xi32>
    %c2146121005_i32_4 = arith.constant 2146121005 : i32
    %42 = vector.broadcast %c2146121005_i32_4 : i32 to vector<4x32xi32>
    %43 = arith.muli %41, %42 : vector<4x32xi32>
    %c15_i32_5 = arith.constant 15 : i32
    %44 = vector.broadcast %c15_i32_5 : i32 to vector<4x32xi32>
    %45 = arith.shrui %43, %44 : vector<4x32xi32>
    %46 = arith.xori %43, %45 : vector<4x32xi32>
    %c-2073254261_i32_6 = arith.constant -2073254261 : i32
    %47 = vector.broadcast %c-2073254261_i32_6 : i32 to vector<4x32xi32>
    %48 = arith.muli %46, %47 : vector<4x32xi32>
    %c16_i32_7 = arith.constant 16 : i32
    %49 = vector.broadcast %c16_i32_7 : i32 to vector<4x32xi32>
    %50 = arith.shrui %48, %49 : vector<4x32xi32>
    %51 = arith.xori %48, %50 : vector<4x32xi32>
    %c9_i32 = arith.constant 9 : i32
    %52 = vector.broadcast %c9_i32 : i32 to vector<4x32xi32>
    %53 = arith.shrui %37, %52 : vector<4x32xi32>
    %c1065353216_i32 = arith.constant 1065353216 : i32
    %54 = vector.broadcast %c1065353216_i32 : i32 to vector<4x32xi32>
    %55 = arith.ori %53, %54 : vector<4x32xi32>
    %56 = tpu.bitcast %55 : vector<4x32xi32> -> vector<4x32xf32>
    %cst = arith.constant 2.000000e+00 : f32
    %57 = vector.broadcast %cst : f32 to vector<4x32xf32>
    %58 = arith.subf %57, %56 : vector<4x32xf32>
    %c9_i32_8 = arith.constant 9 : i32
    %59 = vector.broadcast %c9_i32_8 : i32 to vector<4x32xi32>
    %60 = arith.shrui %51, %59 : vector<4x32xi32>
    %c1065353216_i32_9 = arith.constant 1065353216 : i32
    %61 = vector.broadcast %c1065353216_i32_9 : i32 to vector<4x32xi32>
    %62 = arith.ori %60, %61 : vector<4x32xi32>
    %63 = tpu.bitcast %62 : vector<4x32xi32> -> vector<4x32xf32>
    %cst_10 = arith.constant 1.000000e+00 : f32
    %64 = vector.broadcast %cst_10 : f32 to vector<4x32xf32>
    %65 = arith.subf %63, %64 : vector<4x32xf32>
    %66 = math.log %58 : vector<4x32xf32>
    %cst_11 = arith.constant -2.000000e+00 : f32
    %67 = vector.broadcast %cst_11 : f32 to vector<4x32xf32>
    %68 = arith.mulf %67, %66 : vector<4x32xf32>
    %69 = math.sqrt %68 : vector<4x32xf32>
    %cst_12 = arith.constant 6.28318548 : f32
    %70 = vector.broadcast %cst_12 : f32 to vector<4x32xf32>
    %71 = arith.mulf %70, %65 : vector<4x32xf32>
    %72 = math.cos %71 : vector<4x32xf32>
    %73 = arith.mulf %69, %72 : vector<4x32xf32>
    %74 = math.sin %71 : vector<4x32xf32>
    %75 = arith.mulf %69, %74 : vector<4x32xf32>
    %76 = tpu.concatenate %73, %75 in 0 : vector<4x32xf32>, vector<4x32xf32> -> vector<8x32xf32>
    %77 = tpu.iota {dimensions = array<i32: 0>} : vector<8x1xi32>
    %78 = vector.broadcast %0 : i32 to vector<8x1xi32>
    %79 = arith.addi %77, %78 : vector<8x1xi32>
    %80 = arith.index_cast %arg0 : i32 to index
    %81 = memref.load %arg2[%80] : memref<2xi32, #tpu.memory_space<smem>>
    %82 = arith.sitofp %81 : i32 to f32
    %83 = arith.sitofp %79 : vector<8x1xi32> to vector<8x1xf32>
    %84 = vector.broadcast %82 : f32 to vector<8x1xf32>
    %85 = arith.subf %84, %83 : vector<8x1xf32>
    %cst_13 = arith.constant 0.000000e+00 : f32
    %86 = vector.broadcast %cst_13 : f32 to vector<8x1xf32>
    %87 = arith.maximumf %85, %86 : vector<8x1xf32>
    %cst_14 = arith.constant 6.000000e+01 : f32
    %88 = vector.broadcast %cst_14 : f32 to vector<8x1xf32>
    %89 = arith.cmpf oge, %87, %88 : vector<8x1xf32>
    %cst_15 = arith.constant 5.000000e+00 : f32
    %90 = vector.broadcast %cst_15 : f32 to vector<8x1xf32>
    %91 = arith.cmpf olt, %87, %90 : vector<8x1xf32>
    %cst_16 = arith.constant 5.000000e+00 : f32
    %92 = vector.broadcast %cst_16 : f32 to vector<8x1xf32>
    %93 = arith.subf %87, %92 : vector<8x1xf32>
    %cst_17 = arith.constant 0.0181818176 : f32
    %94 = vector.broadcast %cst_17 : f32 to vector<8x1xf32>
    %95 = arith.mulf %93, %94 : vector<8x1xf32>
    %cst_18 = arith.constant 0.000000e+00 : f32
    %96 = vector.broadcast %cst_18 : f32 to vector<8x1xf32>
    %97 = arith.select %91, %96, %95 : vector<8x1xi1>, vector<8x1xf32>
    %cst_19 = arith.constant 1.000000e+00 : f32
    %98 = vector.broadcast %cst_19 : f32 to vector<8x1xf32>
    %99 = arith.select %89, %98, %97 : vector<8x1xi1>, vector<8x1xf32>
    %cst_20 = arith.constant 5.000000e-01 : f32
    %100 = vector.broadcast %cst_20 : f32 to vector<8x1xf32>
    %101 = arith.mulf %99, %100 : vector<8x1xf32>
    %102 = vector.broadcast %101 : vector<8x1xf32> to vector<8x32xf32>
    %103 = arith.mulf %76, %102 : vector<8x32xf32>
    %c0_21 = arith.constant 0 : index
    %c0_22 = arith.constant 0 : index
    %c0_23 = arith.constant 0 : index
    %104 = vector.load %arg4[%c0_21, %c0_22, %c0_23] : memref<1x8x32xf32, #tpu.memory_space<vmem>>, vector<1x8x32xf32>
    %105 = vector.shape_cast %104 : vector<1x8x32xf32> to vector<8x32xf32>
    %106 = vector.shape_cast %103 : vector<8x32xf32> to vector<1x8x32xf32>
    tpu.vector_store %arg4[%c0_21, %c0_22, %c0_23], %106 {strides = array<i32>} : memref<1x8x32xf32, #tpu.memory_space<vmem>>, vector<1x8x32xf32>,
    return
  }
  func.func @transform_0(%arg0: i32, %arg1: i32, %arg2: memref<2xi32, #tpu.memory_space<smem>>, %arg3: memref<1xi32, #tpu.memory_space<smem>>) -> (i32, i32, i32) {
    %c0_i32 = arith.constant 0 : i32
    %c0_i32_0 = arith.constant 0 : i32
    return %arg0, %arg1, %c0_i32 : i32, i32, i32
  }
}

</mosaic_0001>

<llo_original>
// kernel: tpu_custom_call.1
$region0: #{tpu_custom_call.1}
  #allocation0 [shape = 'u32[]', space=smem, size = 0x4, offset = 0x4, fixed_abs, tag = 'smem constant byte address 0x4 - core index']
  #allocation1 [shape = 'u32[144,128]{1,0:T(1,128)}', space=vmem, size = 0x12000, scoped, tag = 'internal scratch']
  #allocation2 [shape = 's32[1]{0}', space=sflag, size = 0x4, scoped, tag = 'scoped memory for tpu_custom_call.1']
  #allocation3 [shape = 'u8[512]{0}', space=smem, size = 0x200, scoped, tag = 'prefetched SMEM operand 0']
  #allocation4 [shape = 's32[1]{0:T(128)S(6)}', space=smem, size = 0x200, scoped, tag = 'prefetched SMEM operand 1']
  %s0 = inlined_call_operand.vmem [shape: s32[2], index: 0, kind: input, shape index: {}]
  %s1 = inlined_call_operand.<no memory space> [shape: s32[1], index: 1, kind: input, shape index: {}]
  %s2 = inlined_call_operand.hbm [shape: f32[2,8,32], index: 2, kind: output, shape index: {}]
  %s3 = sld [smem:[#allocation0]]
  $region25: #{tpu_custom_call.1} parent=0
    _
  %s5 = ssub.s32 1, %s3
  %s6 = scalar_select 0, %s5, %s3
  %s7 = sshll.u32 %s0, 4
  %s8 = int_to_ptr.vmem [resolvable:$true] %s7
  %10 = dma.vmem_to_smem %s8, 16, [#allocation3], [#allocation2]
  %11 = sst [smem:[#allocation4]] %s1
  %12 = dma.done [#allocation2], 16
  %13 = sfence
  $region1: #{tpu_custom_call.1} parent=0
    #allocation5 [shape = 'u8[8192]{0}', space=vmem, size = 0x2000, scoped, tag = 'output window, operand 0']
    #allocation6 [shape = 's32[2]{0}', space=sflag, size = 0x8, scoped, tag = 'scoped memory for tpu_custom_call.1']
    %14 = vsyncpa [#allocation6], 0
    %s15 = scalar_lea.sflag [#allocation6], 1
    %16 = vsyncpa %s15, 0
    loop: start=0, step=1, limit=3
    $region2: #{tpu_custom_call.1} parent=1 // loop_pre_header
      _
    $region3: #{tpu_custom_call.1} parent=1 // loop_header
      %s18 = sphi 0, %s22
      %p19 = scmp.ge.s32.totalorder %s18, 3
      %s24 = sphi 0, %s34
      %s25 = sphi 0, %s30
      %s26 = sphi 0, %s24
      %s27 = sphi 0, %s25
      %s39 = sphi 0, %s41
      %s42 = sphi 0, %s39
      %s52 = sphi 0, %s42
    $region4: #{tpu_custom_call.1} parent=1 // loop_header_branch
      %21 = sbr.rel (%p19) target = $region8
    $region5: #{tpu_custom_call.1} parent=1 // loop_body
      %s23 = ssub.s32 %s18, 1
      %s28 = sadd.s32 1, %s25
      %p29 = scmp.ge.s32.totalorder %s28, 1
      %s30 = scalar_select %p29, 0, %s28
      %s31 = sadd.s32 1, %s24
      %s32 = scalar_select %p29, %s31, %s24
      %p33 = scmp.ge.s32.totalorder %s32, 2
      %s34 = scalar_select %p33, 0, %s32
      %s35 = ssub.s32 %s24, %s34
      %s36 = ssub.s32 %s25, %s30
      %s37 = sor.u32 %s35, %s36
      %p38 = scmp.eq.s32.totalorder %s37, 0
      %s40 = sadd.s32 %s39, 1
      %s41 = scalar_select %p38, %s39, %s40
      %p43 = pneg %p38
      %p44 = scmp.eq.s32.totalorder %s18, 1
      %p45 = por %p43, %p44
      %p46 = scmp.ne.s32.totalorder %s39, %s42
      %p47 = scmp.eq.s32.totalorder %s18, 0
      %p48 = por %p46, %p47
      %p49 = scmp.ne.s32.totalorder %s39, %s42
      %p50 = scmp.eq.s32.totalorder %s23, 1
      %p51 = por %p49, %p50
      %p53 = scmp.ne.s32.totalorder %s42, %s52
      %p54 = scmp.eq.s32.totalorder %s23, 0
      %p55 = por %p53, %p54
      %p56 = scmp.lt.s32.totalorder %s18, 2
      // Predicated region
      $region9: #{tpu_custom_call.1} parent=5 // pred_check
        %p57 = pneg %p56
      $region10: #{tpu_custom_call.1} parent=5 // pred_check_branch
        %59 = sbr.rel (%p57) target = $region12
      $region11: #{tpu_custom_call.1} parent=5 // pred_region
        %p60 = pneg %p48
        %p61 = pneg %p45
        %s62 = sand.u32 %s39, 1
        %s63 = scalar_lea.sflag [#allocation6], %s62
        %s64 = sand.u32 %s39, 1
        %s65 = smul.addr %s64, 8
        %s66 = scalar_lea.vmem [#allocation5], %s65
        %s67 = smul.u32 %s25, 8
        %v68 = vlaneseq
        %v69 = vshrl.u32 %v68, 7
        %v70 = vlaneseq
        %v71 = vand.u32 %v70, 127
        %s72 = smul.u32 %s24, 8
        %v73 = vstv %s67
        %v74 = vadd.s32 %v73, %v69
        %v75 = vstv %s72
        %v76 = vadd.s32 %v75, %v74
        %v77 = vmul.u32 %v76, 32
        %v78 = vadd.s32 %v77, %v71
        %s79 = sld [smem:[#allocation4]]
        %s80 = smul.u32 %s79, 2654435769
        %s81 = sadd.s32 %s80, 74565
        %v82 = vmul.u32 %v78, 2
        %v83 = vstv %s81
        %v84 = vxor.u32 %v82, %v83
        %v85 = vadd.s32 %v82, 1
        %v86 = vxor.u32 %v85, %v83
        %v87 = vshrl.u32 %v84, 16
        %v88 = vxor.u32 %v84, %v87
        %v89 = vmul.u32 %v88, 2146121005
        %v90 = vshrl.u32 %v89, 15
        %v91 = vxor.u32 %v89, %v90
        %v92 = vmul.u32 %v91, 2221713035
        %v93 = vshrl.u32 %v92, 16
        %v94 = vxor.u32 %v92, %v93
        %v95 = vshrl.u32 %v86, 16
        %v96 = vxor.u32 %v86, %v95
        %v97 = vmul.u32 %v96, 2146121005
        %v98 = vshrl.u32 %v97, 15
        %v99 = vxor.u32 %v97, %v98
        %v100 = vmul.u32 %v99, 2221713035
        %v101 = vshrl.u32 %v100, 16
        %v102 = vxor.u32 %v100, %v101
        %v103 = vshrl.u32 %v94, 9
        %v104 = vor.u32 %v103, 1065353216
        %v106 = vsub.f32 2.0, %v104
        %v107 = vshrl.u32 %v102, 9
        %v108 = vor.u32 %v107, 1065353216
        %v110 = vsub.f32 %v108, 1.0
        %v111 = vlog2.pop %v106
        %v112 = vmul.f32 %v111, 0.6931472
        %v113 = vmul.f32 %v112, -2.0
        %v114 = vrsqrt.pop %v113
        %v115 = vmul.f32 %v113, %v114
        %vm116 = vcmp.eq.f32.partialorder %v113, inf
        %v117 = vsel %vm116, %v113, %v115
        %vm118 = vcmp.eq.f32.partialorder %v113, 0.0
        %v119 = vand.u32 %v113, 2147483648
        %v120 = vsel %vm118, %v119, %v117
        %v121 = vmul.f32 %v110, 6.2831855
        %v122 = vand.u32 2147483647, %v121
        %vm123 = vcmp.le.f32.partialorder %v122, 0.7853982
        %vm124 = vcmp.lt.s32.totalorder %v121, 0
        %v125 = vand.u32 %v121, 2139095040
        %v126 = vshrl.u32 %v125, 23
        %v127 = vsub.s32 %v126, 127
        %v128 = vand.u32 2147483647, %v121
        %v129 = vand.u32 %v128, 8388607
        %v130 = vor.u32 %v129, 8388608
        %v131 = vsub.s32 0, %v130
        %v132 = vadd.s32 %v127, 1
        %vm133 = vcmp.gt.s32.totalorder %v132, 0
        %v134 = vsel %vm133, %v132, 0
        %v135 = vshrl.u32 %v134, 5
        %v136 = vand.u32 %v134, 31
        %v137 = vsub.s32 32, %v136
        %v138 = vshrl.u32 683565275, %v137
        %v139 = vshll.u32 683565275, %v136
        %v140 = vshrl.u32 2475754826, %v137
        %v141 = vor.u32 %v139, %v140
        %v142 = vshll.u32 2475754826, %v136
        %v143 = vshrl.u32 2131351028, %v137
        %v144 = vor.u32 %v142, %v143
        %v145 = vshll.u32 2131351028, %v136
        %v146 = vshrl.u32 2102212464, %v137
        %v147 = vor.u32 %v145, %v146
        %v148 = vshll.u32 2102212464, %v136
        %v149 = vshrl.u32 920167782, %v137
        %v150 = vor.u32 %v148, %v149
        %v151 = vshll.u32 920167782, %v136
        %v152 = vshrl.u32 1326507024, %v137
        %v153 = vor.u32 %v151, %v152
        %vm154 = vcmp.lt.s32.totalorder %v135, 1
        %vm155 = vcmp.lt.s32.totalorder %v135, 2
        %vm156 = vcmp.lt.s32.totalorder %v135, 3
        %vm157 = vcmp.lt.s32.totalorder %v135, 4
        %v158 = vsel %vm154, %v138, %v141
        %v159 = vsel %vm157, %v147, 2102212464
        %v160 = vsel %vm156, %v144, %v159
        %v161 = vsel %vm155, %v158, %v160
        %v162 = vsel %vm154, %v141, %v144
        %v163 = vsel %vm157, %v150, 920167782
        %v164 = vsel %vm156, %v147, %v163
        %v165 = vsel %vm155, %v162, %v164
        %v166 = vsel %vm154, %v144, %v147
        %v167 = vsel %vm157, %v153, 1326507024
        %v168 = vsel %vm156, %v150, %v167
        %v169 = vsel %vm155, %v166, %v168
        %v170 = vshll.u32 %v130, 8
        %v171 = vmul.u32.u64.compose %v170, %v169
        %v172 = vextract.low.u32 %v171
        %v173 = vextract.high.u32 %v171
        %v174 = vmul.u32.u64.compose %v170, %v165
        %v175 = vextract.low.u32 %v174
        %v176 = vextract.high.u32 %v174
        %v177 = vmul.u32 %v170, %v161
        %v178 = vadd.s32 %v173, %v175
        %vm179 = vc.u32 %v173, %v175
        %v180 = vadd.s32 %v176, 1
        %v181 = vsel %vm179, %v180, %v176
        %v182 = vadd.s32 %v177, %v181
        %v183 = vadd.s32 %v182, 536870912
        %v184 = vshrl.u32 %v183, 30
        %v185 = vshll.u32 %v184, 30
        %v186 = vsub.s32 %v182, %v185
        %vm187 = vcmp.lt.s32.totalorder %v186, 0
        %v188 = vsub.s32 0, %v186
        %v189 = vsel %vm187, %v188, %v186
        %v190 = vclz %v189
        %v191 = vsub.s32 %v190, 2
        %vm192 = vcmp.gt.s32.totalorder 0, %v191
        %v193 = vsel %vm192, 0, %v191
        %v194 = vsub.s32 32, %v193
        %v195 = vshll.u32 %v186, %v193
        %v196 = vshrl.u32 %v178, %v194
        %v197 = vor.u32 %v195, %v196
        %v198 = vsub.s32 4294967266, %v193
        %v199 = vadd.s32 %v198, 127
        %v200 = vshll.u32 %v199, 23
        %v201 = vor.u32 4788187, %v200
        %v202 = vand.u32 2147483647, %v201
        %v204 = vcvt.s32.f32 %v197
        %v205 = vmul.f32 %v204, %v202
        %v206 = vxor.u32 %v205, 2147483648
        %v207 = vsel %vm124, %v206, %v205
        %v208 = vsub.s32 4, %v184
        %v209 = vsel %vm124, %v208, %v184
        %v210 = vsel %vm123, %v121, %v207
        %v211 = vsel %vm123, 0, %v209
        %v212 = vcosq.f32.pop %v210
        %v213 = vsinq.f32.pop %v210
        %vm214 = vweird.f32 %v121
        %v215 = vand.u32 %v211, 3
        %vm216 = vcmp.lt.s32.totalorder %v215, 2
        %vm217 = vcmp.eq.s32.totalorder %v215, 0
        %v218 = vxor.u32 %v213, 2147483648
        %v219 = vsel %vm217, %v212, %v218
        %vm220 = vcmp.eq.s32.totalorder %v215, 2
        %v221 = vxor.u32 %v212, 2147483648
        %v222 = vsel %vm220, %v221, %v213
        %v223 = vsel %vm216, %v219, %v222
        %v224 = vsel %vm214, nan, %v223
        %v225 = vmul.f32 %v120, %v224
        %v226 = vand.u32 2147483647, %v121
        %vm227 = vcmp.le.f32.partialorder %v226, 0.7853982
        %vm228 = vcmp.lt.s32.totalorder %v121, 0
        %v229 = vand.u32 %v121, 2139095040
        %v230 = vshrl.u32 %v229, 23
        %v231 = vsub.s32 %v230, 127
        %v232 = vand.u32 2147483647, %v121
        %v233 = vand.u32 %v232, 8388607
        %v234 = vor.u32 %v233, 8388608
        %v235 = vsub.s32 0, %v234
        %v236 = vadd.s32 %v231, 1
        %vm237 = vcmp.gt.s32.totalorder %v236, 0
        %v238 = vsel %vm237, %v236, 0
        %v239 = vshrl.u32 %v238, 5
        %v240 = vand.u32 %v238, 31
        %v241 = vsub.s32 32, %v240
        %v242 = vshrl.u32 683565275, %v241
        %v243 = vshll.u32 683565275, %v240
        %v244 = vshrl.u32 2475754826, %v241
        %v245 = vor.u32 %v243, %v244
        %v246 = vshll.u32 2475754826, %v240
        %v247 = vshrl.u32 2131351028, %v241
        %v248 = vor.u32 %v246, %v247
        %v249 = vshll.u32 2131351028, %v240
        %v250 = vshrl.u32 2102212464, %v241
        %v251 = vor.u32 %v249, %v250
        %v252 = vshll.u32 2102212464, %v240
        %v253 = vshrl.u32 920167782, %v241
        %v254 = vor.u32 %v252, %v253
        %v255 = vshll.u32 920167782, %v240
        %v256 = vshrl.u32 1326507024, %v241
        %v257 = vor.u32 %v255, %v256
        %vm258 = vcmp.lt.s32.totalorder %v239, 1
        %vm259 = vcmp.lt.s32.totalorder %v239, 2
        %vm260 = vcmp.lt.s32.totalorder %v239, 3
        %vm261 = vcmp.lt.s32.totalorder %v239, 4
        %v262 = vsel %vm258, %v242, %v245
        %v263 = vsel %vm261, %v251, 2102212464
        %v264 = vsel %vm260, %v248, %v263
        %v265 = vsel %vm259, %v262, %v264
        %v266 = vsel %vm258, %v245, %v248
        %v267 = vsel %vm261, %v254, 920167782
        %v268 = vsel %vm260, %v251, %v267
        %v269 = vsel %vm259, %v266, %v268
        %v270 = vsel %vm258, %v248, %v251
        %v271 = vsel %vm261, %v257, 1326507024
        %v272 = vsel %vm260, %v254, %v271
        %v273 = vsel %vm259, %v270, %v272
        %v274 = vshll.u32 %v234, 8
        %v275 = vmul.u32.u64.compose %v274, %v273
        %v276 = vextract.low.u32 %v275
        %v277 = vextract.high.u32 %v275
        %v278 = vmul.u32.u64.compose %v274, %v269
        %v279 = vextract.low.u32 %v278
        %v280 = vextract.high.u32 %v278
        %v281 = vmul.u32 %v274, %v265
        %v282 = vadd.s32 %v277, %v279
        %vm283 = vc.u32 %v277, %v279
        %v284 = vadd.s32 %v280, 1
        %v285 = vsel %vm283, %v284, %v280
        %v286 = vadd.s32 %v281, %v285
        %v287 = vadd.s32 %v286, 536870912
        %v288 = vshrl.u32 %v287, 30
        %v289 = vshll.u32 %v288, 30
        %v290 = vsub.s32 %v286, %v289
        %vm291 = vcmp.lt.s32.totalorder %v290, 0
        %v292 = vsub.s32 0, %v290
        %v293 = vsel %vm291, %v292, %v290
        %v294 = vclz %v293
        %v295 = vsub.s32 %v294, 2
        %vm296 = vcmp.gt.s32.totalorder 0, %v295
        %v297 = vsel %vm296, 0, %v295
        %v298 = vsub.s32 32, %v297
        %v299 = vshll.u32 %v290, %v297
        %v300 = vshrl.u32 %v282, %v298
        %v301 = vor.u32 %v299, %v300
        %v302 = vsub.s32 4294967266, %v297
        %v303 = vadd.s32 %v302, 127
        %v304 = vshll.u32 %v303, 23
        %v305 = vor.u32 4788187, %v304
        %v306 = vand.u32 2147483647, %v305
        %v308 = vcvt.s32.f32 %v301
        %v309 = vmul.f32 %v308, %v306
        %v310 = vxor.u32 %v309, 2147483648
        %v311 = vsel %vm228, %v310, %v309
        %v312 = vsub.s32 4, %v288
        %v313 = vsel %vm228, %v312, %v288
        %v314 = vsel %vm227, %v121, %v311
        %v315 = vsel %vm227, 0, %v313
        %v316 = vcosq.f32.pop %v314
        %v317 = vsinq.f32.pop %v314
        %vm318 = vweird.f32 %v121
        %v319 = vadd.s32 %v315, 3
        %v320 = vand.u32 %v319, 3
        %vm321 = vcmp.lt.s32.totalorder %v320, 2
        %vm322 = vcmp.eq.s32.totalorder %v320, 0
        %v323 = vxor.u32 %v317, 2147483648
        %v324 = vsel %vm322, %v316, %v323
        %vm325 = vcmp.eq.s32.totalorder %v320, 2
        %v326 = vxor.u32 %v316, 2147483648
        %v327 = vsel %vm325, %v326, %v317
        %v328 = vsel %vm321, %v324, %v327
        %v329 = vsel %vm318, nan, %v328
        %v330 = vmul.f32 %v120, %v329
        %v332 = vrot.slane %v330, 4
        %vm334 = vcmask 1043456
        %v335 = vsel %vm334, %v225, %v332
        %s336 = sld [smem:[#allocation3 + %s24]]
        %s337 = scvt.s32.f32 %s336
        %v338 = vcvt.s32.f32 %v74
        %v339 = vstv %s337
        %v340 = vsub.f32 %v339, %v338
        %v341 = vmax.f32 %v340, 0.0
        %vm342 = vcmp.ge.f32.partialorder %v341, 60.0
        %vm343 = vcmp.lt.f32.partialorder %v341, 5.0
        %v344 = vsub.f32 %v341, 5.0
        %v345 = vmul.f32 %v344, 0.018181818
        %v346 = vsel %vm343, 0.0, %v345
        %v347 = vsel %vm342, 1.0, %v346
        %v348 = vmul.f32 %v347, 0.5
        %v349 = vmul.f32 %v335, %v348
        %vm350 = vcmask 261120
        %351 = vst.msk [vmem:[%s66] sm:$0xff] %vm350, %v349
        %s352 = sand.u32 %s39, 1
        %s353 = scalar_lea.sflag [#allocation6], %s352
        %s354 = sand.u32 %s39, 1
        %s355 = smul.addr %s354, 8
        %s356 = scalar_lea.vmem [#allocation5], %s355
        // Predicated region
        $region13: #{tpu_custom_call.1} parent=11 // pred_check
          %p357 = pneg %p45
        $region14: #{tpu_custom_call.1} parent=11 // pred_check_branch
          %359 = sbr.rel (%p357) target = $region16
        $region15: #{tpu_custom_call.1} parent=11 // pred_region
          %s361 = ssub.s32 128, 128
          %362 = vsyncadd %s353, %s361
          %s363 = sadd.s32 %s25, %s24
          %s364 = smul.addr %s363, 128
          %s365 = scalar_lea.hbm %s2, %s364
          %s367 = sshll.u32 %s356, 4
          %s368 = int_to_ptr.vmem [resolvable:$true] %s367
          %370 = dma.vmem_to_hbm [thread:$0]  %s368, 128, %s365, %s353
        $region16: #{tpu_custom_call.1} parent=11 // pred_fallthru
          _
      $region12: #{tpu_custom_call.1} parent=5 // pred_fallthru
        _
      %p371 = scmp.le.s32.totalorder 1, %s18
      // Predicated region
      $region17: #{tpu_custom_call.1} parent=5 // pred_check
        %p372 = pneg %p371
      $region18: #{tpu_custom_call.1} parent=5 // pred_check_branch
        %374 = sbr.rel (%p372) target = $region20
      $region19: #{tpu_custom_call.1} parent=5 // pred_region
        %s375 = ssub.s32 %s18, 1
        // Predicated region
        $region21: #{tpu_custom_call.1} parent=19 // pred_check
          %p376 = pneg %p51
        $region22: #{tpu_custom_call.1} parent=19 // pred_check_branch
          %378 = sbr.rel (%p376) target = $region24
        $region23: #{tpu_custom_call.1} parent=19 // pred_region
          %s379 = sand.u32 %s42, 1
          %s380 = scalar_lea.sflag [#allocation6], %s379
          %s381 = sand.u32 %s42, 1
          %s382 = smul.addr %s381, 8
          %s383 = scalar_lea.vmem [#allocation5], %s382
          %384 = dma.done %s380, 128
        $region24: #{tpu_custom_call.1} parent=19 // pred_fallthru
          _
      $region20: #{tpu_custom_call.1} parent=5 // pred_fallthru
        _
    $region6: #{tpu_custom_call.1} parent=1 // loop_footer
      %s22 = sadd.s32 1, %s18
    $region7: #{tpu_custom_call.1} parent=1 // loop_footer_branch
      %17 = sbr.rel target = $region3
    $region8: #{tpu_custom_call.1} parent=1 // loop_exit
      _
    %385 = vsyncpa [#allocation6], 1
    %s386 = scalar_lea.sflag [#allocation6], 1
    %387 = vsyncpa %s386, 1

</llo_original>
